<compile_context>
chip_gen: v5e
topology: v5e:2x2
jax: 0.10.0
libtpu: 0.0.40
codegen_flags: <defaults>
</compile_context>

<pallas_src>
import functools

import jax
import jax.numpy as jnp
from jax.experimental import pallas as pl
from jax.experimental.pallas import tpu as pltpu


def _inception_kernel(x_ref, w_ref, b_ref, o_ref, col_scr, *,
                      H, W, Cin, Cout, kmax, pmax, bn):
    """One batch-block of the fused inception conv (single big-K MXU dot).

    x_ref:   (bn, H, W*Cin)         lane-dense unpadded input (f32)
    w_ref:   (kmax*W*Cin, W*Cout)   pre-averaged block-Toeplitz weight (cdtype)
    b_ref:   (1, W*Cout)            pre-averaged bias tiled along W (f32)
    o_ref:   (bn, H, W*Cout)        lane-dense output (f32)
    col_scr: (bn, H, kmax*W*Cin)    im2col LHS scratch (f32)
    """
    K = W * Cin
    WCout = W * Cout
    ktot = kmax * K

    x = x_ref[...]                                   # (bn, H, K): one VMEM load

    # Build the im2col LHS: dy-shifted copy of x lands at lane offset dy*K.
    # Only the small H-halo rows are zeroed, and they are zeroed every grid
    # step (megacore-safe; interior rows are fully overwritten anyway).
    for dy in range(kmax):                           # static unroll: kmax copies
        shift = dy - pmax
        src_lo = max(0, shift)
        dst_lo = max(0, -shift)
        n = H - abs(shift)                           # valid output rows
        if dst_lo > 0:                               # top halo rows -> 0
            col_scr[:, 0:dst_lo, dy * K:(dy + 1) * K] = jnp.zeros(
                (bn, dst_lo, K), col_scr.dtype)
        if dst_lo + n < H:                           # bottom halo rows -> 0
            col_scr[:, dst_lo + n:H, dy * K:(dy + 1) * K] = jnp.zeros(
                (bn, H - dst_lo - n, K), col_scr.dtype)
        col_scr[:, dst_lo:dst_lo + n, dy * K:(dy + 1) * K] = \
            x[:, src_lo:src_lo + n, :]

    # One big-K matmul: (bn*H, kmax*W*Cin) @ (kmax*W*Cin, W*Cout), f32 acc.
    lhs = col_scr[...].reshape(bn * H, ktot).astype(w_ref.dtype)   # single cast
    acc = jnp.dot(lhs, w_ref[...], preferred_element_type=jnp.float32)
    res = acc + b_ref[...]                           # broadcast bias add (f32)
    o_ref[...] = res.reshape(bn, H, WCout).astype(o_ref.dtype)


def inception_block_v1(x_nhwc, weights, biases, *, batch_block=None, use_bf16=True):
    """Fused Inception_Block_V1 forward.

    x_nhwc:  (N, H, W, Cin); weights[i]: (2i+1, 2i+1, Cin, Cout) HWIO;
    biases[i]: (Cout,).  Returns (N, H, W, Cout) float32.

    batch_block: batch elements per grid step.  None -> auto: keep >= 2 grid
      steps (v7x megacore / DMA-compute overlap) while growing M = bn*H.
    use_bf16: bf16 MXU operands (weight + LHS), f32 accumulation (default).
    """
    N, H, W, Cin = x_nhwc.shape
    num_kernels = len(weights)
    Cout = weights[0].shape[-1]
    pmax = num_kernels - 1
    kmax = 2 * pmax + 1
    K = W * Cin
    ktot = kmax * K
    WCout = W * Cout

    cdtype = jnp.bfloat16 if use_bf16 else jnp.float32

    # ---- batch_block selection ----------------------------------------------
    if batch_block is None:
        bn = 1
        for d in range(1, N + 1):
            if N % d == 0 and d * H <= 128 and N // d >= 2:
                bn = d
    else:
        bn = batch_block
    assert N % bn == 0, "batch_block must divide N"

    # ---- VMEM size guard (v7x: 64 MiB physical / 32 MiB default scoped) -----
    w_bytes = ktot * WCout * jnp.dtype(cdtype).itemsize
    if w_bytes > 8 * 1024 * 1024:
        # TODO(synk): switch to im2col-over-(dy,dx,Cin) with H tiling + halo
        # for production TimesNet shapes (O(W^2) Toeplitz weight too large).
        raise NotImplementedError(
            f"block-Toeplitz weight ({w_bytes} B) too large for this kernel")

    # ---- wrapper-side algebra (tiny, runs once in XLA) -----------------------
    # Mean of zero-embedded kernels: (kmax, kmax, Cin, Cout).
    w_sum = jnp.zeros((kmax, kmax, Cin, Cout), jnp.float32)
    for i, w in enumerate(weights):
        off = pmax - i
        w_sum = w_sum + jnp.pad(w.astype(jnp.float32),
                                ((off, off), (off, off), (0, 0), (0, 0)))
    w_mean = w_sum / num_kernels

    # Block-Toeplitz over W with the W zero padding folded into the matrix:
    #   w_big[dy*K + w_in*Cin + c, w_out*Cout + co] =
    #       w_mean[dy, w_in - w_out + pmax, c, co]   if 0 <= w_in-w_out+pmax < kmax
    #       0                                        otherwise
    win = jnp.arange(W)[:, None]                    # (W, 1)  input column
    wout = jnp.arange(W)[None, :]                   # (1, W)  output column
    dx = win - wout + pmax                          # (W, W)
    valid = (dx >= 0) & (dx < kmax)
    dx_c = jnp.clip(dx, 0, kmax - 1)
    gath = w_mean[:, dx_c]                          # (kmax, W_in, W_out, Cin, Cout)
    gath = jnp.where(valid[None, :, :, None, None], gath, 0.0)
    w_big = jnp.transpose(gath, (0, 1, 3, 2, 4)).reshape(ktot, WCout)
    w_big = w_big.astype(cdtype)

    b_mean = jnp.mean(jnp.stack(biases, 0).astype(jnp.float32), axis=0)  # (Cout,)
    b_row = jnp.tile(b_mean, W).reshape(1, WCout)

    x_flat = x_nhwc.reshape(N, H, K).astype(jnp.float32)   # lane-dense input

    kernel = functools.partial(_inception_kernel, H=H, W=W, Cin=Cin, Cout=Cout,
                               kmax=kmax, pmax=pmax, bn=bn)
    out = pl.pallas_call(
        kernel,
        out_shape=jax.ShapeDtypeStruct((N, H, WCout), jnp.float32),
        grid=(N // bn,),
        in_specs=[
            pl.BlockSpec((bn, H, K), lambda n: (n, 0, 0)),
            pl.BlockSpec((ktot, WCout), lambda n: (0, 0)),
            pl.BlockSpec((1, WCout), lambda n: (0, 0)),
        ],
        out_specs=pl.BlockSpec((bn, H, WCout), lambda n: (n, 0, 0)),
        scratch_shapes=[pltpu.VMEM((bn, H, ktot), jnp.float32)],
        compiler_params=pltpu.CompilerParams(
            dimension_semantics=("parallel",),
            vmem_limit_bytes=32 * 1024 * 1024),
    )(x_flat, w_big, b_row)

    # lane-dense (N, H, W*Cout) -> NHWC (wrapper-side layout plumbing)
    return out.reshape(N, H, W, Cout)


def init_params(key, in_channels, out_channels, num_kernels):
    """Deterministic kaiming_normal_(mode='fan_out', nonlinearity='relu'), bias=0."""
    weights, biases = [], []
    for i in range(num_kernels):
        k = 2 * i + 1
        key, sub = jax.random.split(key)
        fan_out = out_channels * k * k
        std = (2.0 / fan_out) ** 0.5
        w = jax.random.normal(sub, (k, k, in_channels, out_channels),
                              jnp.float32) * std                 # HWIO
        weights.append(w)
        biases.append(jnp.zeros((out_channels,), jnp.float32))
    return weights, biases


def _reference(x_nhwc, weights, biases):
    outs = []
    for i, (w, b) in enumerate(zip(weights, biases)):
        o = jax.lax.conv_general_dilated(
            x_nhwc, w, window_strides=(1, 1), padding=((i, i), (i, i)),
            dimension_numbers=("NHWC", "HWIO", "NHWC"))
        outs.append(o + b[None, None, None, :])
    return jnp.mean(jnp.stack(outs, axis=-1), axis=-1)


if __name__ == "__main__":
    key = jax.random.PRNGKey(0)
    N, Cin, H, W = 2, 4, 16, 16        # PyTorch NCHW input shape (2, 4, 16, 16)
    Cout, num_kernels = 8, 6

    key, kx = jax.random.split(key)
    x_nchw = jax.random.normal(kx, (N, Cin, H, W), jnp.float32)   # torch layout
    x_nhwc = jnp.transpose(x_nchw, (0, 2, 3, 1))                  # kernel layout
    weights, biases = init_params(key, Cin, Cout, num_kernels)

    ref = _reference(x_nhwc, weights, biases)

    # 1) Default path: bf16 MXU operands, auto batch_block (-> bn=1, grid=(2,)
    #    "parallel": v7x's two TensorCores each take one batch element).
    out_bf16 = jax.block_until_ready(inception_block_v1(x_nhwc, weights, biases))
    assert out_bf16.shape == (N, H, W, Cout)
    err_bf16 = float(jnp.max(jnp.abs(out_bf16 - ref)))
    if err_bf16 > 5e-2:
        raise AssertionError(f"bf16 mismatch vs reference, max_err={err_bf16}")

    # 2) f32 operands, bn=1: validates the algebra tightly.
    out_f32 = jax.block_until_ready(
        inception_block_v1(x_nhwc, weights, biases, batch_block=1, use_bf16=False))
    err_f32 = float(jnp.max(jnp.abs(out_f32 - ref)))
    if not jnp.allclose(out_f32, ref, rtol=1e-4, atol=1e-4):
        raise AssertionError(f"f32 bn=1 mismatch vs reference, max_err={err_f32}")

    # 3) f32, batch folded into one grid step: validates the bn>1 path.
    out_f32b = jax.block_until_ready(
        inception_block_v1(x_nhwc, weights, biases, batch_block=N, use_bf16=False))
    err_f32b = float(jnp.max(jnp.abs(out_f32b - ref)))
    if not jnp.allclose(out_f32b, ref, rtol=1e-4, atol=1e-4):
        raise AssertionError(f"f32 bn=N mismatch vs reference, max_err={err_f32b}")

    out_nchw = jnp.transpose(out_bf16, (0, 3, 1, 2))   # back to PyTorch layout
    assert out_nchw.shape == (N, Cout, H, W)

    print("KERNEL_OK")
</pallas_src>

<mosaic_0001>
module attributes {stable_mosaic.version = 11 : i64} {
  func.func @_inception_kernel(%arg0: i32, %arg1: memref<1x16x64xf32, #tpu.memory_space<vmem>>, %arg2: memref<704x128xbf16, #tpu.memory_space<vmem>>, %arg3: memref<1x128xf32, #tpu.memory_space<vmem>>, %arg4: memref<1x16x128xf32, #tpu.memory_space<vmem>>, %arg5: memref<1x16x704xf32, #tpu.memory_space<vmem>>) attributes {dimension_semantics = [#tpu.dimension_semantics<parallel>], iteration_bounds = array<i64: 2>, scalar_prefetch = 0 : i64, scratch_operands = 1 : i64, tpu.core_type = #tpu.core_type<tc>, window_params = [{transform_indices = @transform_0, window_bounds = array<i64: 1, 16, 64>}, {pipeline_mode = #tpu.pipeline_mode<synchronous>, transform_indices = @transform_1, window_bounds = array<i64: 704, 128>}, {pipeline_mode = #tpu.pipeline_mode<synchronous>, transform_indices = @transform_2, window_bounds = array<i64: 1, 128>}, {transform_indices = @transform_3, window_bounds = array<i64: 1, 16, 128>}]} {
    %c0 = arith.constant 0 : index
    %c0_0 = arith.constant 0 : index
    %c0_1 = arith.constant 0 : index
    %0 = vector.load %arg1[%c0, %c0_0, %c0_1] : memref<1x16x64xf32, #tpu.memory_space<vmem>>, vector<1x16x64xf32>
    %cst = arith.constant 0.000000e+00 : f32
    %1 = vector.broadcast %cst : f32 to vector<1x5x64xf32>
    %c0_2 = arith.constant 0 : index
    %c0_3 = arith.constant 0 : index
    %c0_4 = arith.constant 0 : index
    %2 = vector.load %arg5[%c0_2, %c0_3, %c0_4] : memref<1x16x704xf32, #tpu.memory_space<vmem>>, vector<1x5x64xf32>
    tpu.vector_store %arg5[%c0_2, %c0_3, %c0_4], %1 {strides = array<i32>} : memref<1x16x704xf32, #tpu.memory_space<vmem>>, vector<1x5x64xf32>,
    %3 = vector.extract_strided_slice %0 {offsets = [0, 0, 0], sizes = [1, 11, 64], strides = [1, 1, 1]} : vector<1x16x64xf32> to vector<1x11x64xf32>
    %c0_5 = arith.constant 0 : index
    %c5 = arith.constant 5 : index
    %c0_6 = arith.constant 0 : index
    %4 = vector.load %arg5[%c0_5, %c5, %c0_6] : memref<1x16x704xf32, #tpu.memory_space<vmem>>, vector<1x11x64xf32>
    tpu.vector_store %arg5[%c0_5, %c5, %c0_6], %3 {strides = array<i32>} : memref<1x16x704xf32, #tpu.memory_space<vmem>>, vector<1x11x64xf32>,
    %cst_7 = arith.constant 0.000000e+00 : f32
    %5 = vector.broadcast %cst_7 : f32 to vector<1x4x64xf32>
    %c0_8 = arith.constant 0 : index
    %c0_9 = arith.constant 0 : index
    %c64 = arith.constant 64 : index
    %6 = vector.load %arg5[%c0_8, %c0_9, %c64] : memref<1x16x704xf32, #tpu.memory_space<vmem>>, vector<1x4x64xf32>
    tpu.vector_store %arg5[%c0_8, %c0_9, %c64], %5 {strides = array<i32>} : memref<1x16x704xf32, #tpu.memory_space<vmem>>, vector<1x4x64xf32>,
    %7 = vector.extract_strided_slice %0 {offsets = [0, 0, 0], sizes = [1, 12, 64], strides = [1, 1, 1]} : vector<1x16x64xf32> to vector<1x12x64xf32>
    %c0_10 = arith.constant 0 : index
    %c4 = arith.constant 4 : index
    %c64_11 = arith.constant 64 : index
    %8 = vector.load %arg5[%c0_10, %c4, %c64_11] : memref<1x16x704xf32, #tpu.memory_space<vmem>>, vector<1x12x64xf32>
    tpu.vector_store %arg5[%c0_10, %c4, %c64_11], %7 {strides = array<i32>} : memref<1x16x704xf32, #tpu.memory_space<vmem>>, vector<1x12x64xf32>,
    %cst_12 = arith.constant 0.000000e+00 : f32
    %9 = vector.broadcast %cst_12 : f32 to vector<1x3x64xf32>
    %c0_13 = arith.constant 0 : index
    %c0_14 = arith.constant 0 : index
    %c128 = arith.constant 128 : index
    %10 = vector.load %arg5[%c0_13, %c0_14, %c128] : memref<1x16x704xf32, #tpu.memory_space<vmem>>, vector<1x3x64xf32>
    tpu.vector_store %arg5[%c0_13, %c0_14, %c128], %9 {strides = array<i32>} : memref<1x16x704xf32, #tpu.memory_space<vmem>>, vector<1x3x64xf32>,
    %11 = vector.extract_strided_slice %0 {offsets = [0, 0, 0], sizes = [1, 13, 64], strides = [1, 1, 1]} : vector<1x16x64xf32> to vector<1x13x64xf32>
    %c0_15 = arith.constant 0 : index
    %c3 = arith.constant 3 : index
    %c128_16 = arith.constant 128 : index
    %12 = vector.load %arg5[%c0_15, %c3, %c128_16] : memref<1x16x704xf32, #tpu.memory_space<vmem>>, vector<1x13x64xf32>
    tpu.vector_store %arg5[%c0_15, %c3, %c128_16], %11 {strides = array<i32>} : memref<1x16x704xf32, #tpu.memory_space<vmem>>, vector<1x13x64xf32>,
    %cst_17 = arith.constant 0.000000e+00 : f32
    %13 = vector.broadcast %cst_17 : f32 to vector<1x2x64xf32>
    %c0_18 = arith.constant 0 : index
    %c0_19 = arith.constant 0 : index
    %c192 = arith.constant 192 : index
    %14 = vector.load %arg5[%c0_18, %c0_19, %c192] : memref<1x16x704xf32, #tpu.memory_space<vmem>>, vector<1x2x64xf32>
    tpu.vector_store %arg5[%c0_18, %c0_19, %c192], %13 {strides = array<i32>} : memref<1x16x704xf32, #tpu.memory_space<vmem>>, vector<1x2x64xf32>,
    %15 = vector.extract_strided_slice %0 {offsets = [0, 0, 0], sizes = [1, 14, 64], strides = [1, 1, 1]} : vector<1x16x64xf32> to vector<1x14x64xf32>
    %c0_20 = arith.constant 0 : index
    %c2 = arith.constant 2 : index
    %c192_21 = arith.constant 192 : index
    %16 = vector.load %arg5[%c0_20, %c2, %c192_21] : memref<1x16x704xf32, #tpu.memory_space<vmem>>, vector<1x14x64xf32>
    tpu.vector_store %arg5[%c0_20, %c2, %c192_21], %15 {strides = array<i32>} : memref<1x16x704xf32, #tpu.memory_space<vmem>>, vector<1x14x64xf32>,
    %cst_22 = arith.constant 0.000000e+00 : f32
    %17 = vector.broadcast %cst_22 : f32 to vector<1x1x64xf32>
    %c0_23 = arith.constant 0 : index
    %c0_24 = arith.constant 0 : index
    %c256 = arith.constant 256 : index
    %18 = vector.load %arg5[%c0_23, %c0_24, %c256] : memref<1x16x704xf32, #tpu.memory_space<vmem>>, vector<1x1x64xf32>
    tpu.vector_store %arg5[%c0_23, %c0_24, %c256], %17 {strides = array<i32>} : memref<1x16x704xf32, #tpu.memory_space<vmem>>, vector<1x1x64xf32>,
    %19 = vector.extract_strided_slice %0 {offsets = [0, 0, 0], sizes = [1, 15, 64], strides = [1, 1, 1]} : vector<1x16x64xf32> to vector<1x15x64xf32>
    %c0_25 = arith.constant 0 : index
    %c1 = arith.constant 1 : index
    %c256_26 = arith.constant 256 : index
    %20 = vector.load %arg5[%c0_25, %c1, %c256_26] : memref<1x16x704xf32, #tpu.memory_space<vmem>>, vector<1x15x64xf32>
    tpu.vector_store %arg5[%c0_25, %c1, %c256_26], %19 {strides = array<i32>} : memref<1x16x704xf32, #tpu.memory_space<vmem>>, vector<1x15x64xf32>,
    %c0_27 = arith.constant 0 : index
    %c0_28 = arith.constant 0 : index
    %c320 = arith.constant 320 : index
    %21 = vector.load %arg5[%c0_27, %c0_28, %c320] : memref<1x16x704xf32, #tpu.memory_space<vmem>>, vector<1x16x64xf32>
    tpu.vector_store %arg5[%c0_27, %c0_28, %c320], %0 {strides = array<i32>} : memref<1x16x704xf32, #tpu.memory_space<vmem>>, vector<1x16x64xf32>,
    %cst_29 = arith.constant 0.000000e+00 : f32
    %22 = vector.broadcast %cst_29 : f32 to vector<1x1x64xf32>
    %c0_30 = arith.constant 0 : index
    %c15 = arith.constant 15 : index
    %c384 = arith.constant 384 : index
    %23 = vector.load %arg5[%c0_30, %c15, %c384] : memref<1x16x704xf32, #tpu.memory_space<vmem>>, vector<1x1x64xf32>
    tpu.vector_store %arg5[%c0_30, %c15, %c384], %22 {strides = array<i32>} : memref<1x16x704xf32, #tpu.memory_space<vmem>>, vector<1x1x64xf32>,
    %24 = vector.extract_strided_slice %0 {offsets = [0, 1, 0], sizes = [1, 15, 64], strides = [1, 1, 1]} : vector<1x16x64xf32> to vector<1x15x64xf32>
    %c0_31 = arith.constant 0 : index
    %c0_32 = arith.constant 0 : index
    %c384_33 = arith.constant 384 : index
    %25 = vector.load %arg5[%c0_31, %c0_32, %c384_33] : memref<1x16x704xf32, #tpu.memory_space<vmem>>, vector<1x15x64xf32>
    tpu.vector_store %arg5[%c0_31, %c0_32, %c384_33], %24 {strides = array<i32>} : memref<1x16x704xf32, #tpu.memory_space<vmem>>, vector<1x15x64xf32>,
    %cst_34 = arith.constant 0.000000e+00 : f32
    %26 = vector.broadcast %cst_34 : f32 to vector<1x2x64xf32>
    %c0_35 = arith.constant 0 : index
    %c14 = arith.constant 14 : index
    %c448 = arith.constant 448 : index
    %27 = vector.load %arg5[%c0_35, %c14, %c448] : memref<1x16x704xf32, #tpu.memory_space<vmem>>, vector<1x2x64xf32>
    tpu.vector_store %arg5[%c0_35, %c14, %c448], %26 {strides = array<i32>} : memref<1x16x704xf32, #tpu.memory_space<vmem>>, vector<1x2x64xf32>,
    %28 = vector.extract_strided_slice %0 {offsets = [0, 2, 0], sizes = [1, 14, 64], strides = [1, 1, 1]} : vector<1x16x64xf32> to vector<1x14x64xf32>
    %c0_36 = arith.constant 0 : index
    %c0_37 = arith.constant 0 : index
    %c448_38 = arith.constant 448 : index
    %29 = vector.load %arg5[%c0_36, %c0_37, %c448_38] : memref<1x16x704xf32, #tpu.memory_space<vmem>>, vector<1x14x64xf32>
    tpu.vector_store %arg5[%c0_36, %c0_37, %c448_38], %28 {strides = array<i32>} : memref<1x16x704xf32, #tpu.memory_space<vmem>>, vector<1x14x64xf32>,
    %cst_39 = arith.constant 0.000000e+00 : f32
    %30 = vector.broadcast %cst_39 : f32 to vector<1x3x64xf32>
    %c0_40 = arith.constant 0 : index
    %c13 = arith.constant 13 : index
    %c512 = arith.constant 512 : index
    %31 = vector.load %arg5[%c0_40, %c13, %c512] : memref<1x16x704xf32, #tpu.memory_space<vmem>>, vector<1x3x64xf32>
    tpu.vector_store %arg5[%c0_40, %c13, %c512], %30 {strides = array<i32>} : memref<1x16x704xf32, #tpu.memory_space<vmem>>, vector<1x3x64xf32>,
    %32 = vector.extract_strided_slice %0 {offsets = [0, 3, 0], sizes = [1, 13, 64], strides = [1, 1, 1]} : vector<1x16x64xf32> to vector<1x13x64xf32>
    %c0_41 = arith.constant 0 : index
    %c0_42 = arith.constant 0 : index
    %c512_43 = arith.constant 512 : index
    %33 = vector.load %arg5[%c0_41, %c0_42, %c512_43] : memref<1x16x704xf32, #tpu.memory_space<vmem>>, vector<1x13x64xf32>
    tpu.vector_store %arg5[%c0_41, %c0_42, %c512_43], %32 {strides = array<i32>} : memref<1x16x704xf32, #tpu.memory_space<vmem>>, vector<1x13x64xf32>,
    %cst_44 = arith.constant 0.000000e+00 : f32
    %34 = vector.broadcast %cst_44 : f32 to vector<1x4x64xf32>
    %c0_45 = arith.constant 0 : index
    %c12 = arith.constant 12 : index
    %c576 = arith.constant 576 : index
    %35 = vector.load %arg5[%c0_45, %c12, %c576] : memref<1x16x704xf32, #tpu.memory_space<vmem>>, vector<1x4x64xf32>
    tpu.vector_store %arg5[%c0_45, %c12, %c576], %34 {strides = array<i32>} : memref<1x16x704xf32, #tpu.memory_space<vmem>>, vector<1x4x64xf32>,
    %36 = vector.extract_strided_slice %0 {offsets = [0, 4, 0], sizes = [1, 12, 64], strides = [1, 1, 1]} : vector<1x16x64xf32> to vector<1x12x64xf32>
    %c0_46 = arith.constant 0 : index
    %c0_47 = arith.constant 0 : index
    %c576_48 = arith.constant 576 : index
    %37 = vector.load %arg5[%c0_46, %c0_47, %c576_48] : memref<1x16x704xf32, #tpu.memory_space<vmem>>, vector<1x12x64xf32>
    tpu.vector_store %arg5[%c0_46, %c0_47, %c576_48], %36 {strides = array<i32>} : memref<1x16x704xf32, #tpu.memory_space<vmem>>, vector<1x12x64xf32>,
    %cst_49 = arith.constant 0.000000e+00 : f32
    %38 = vector.broadcast %cst_49 : f32 to vector<1x5x64xf32>
    %c0_50 = arith.constant 0 : index
    %c11 = arith.constant 11 : index
    %c640 = arith.constant 640 : index
    %39 = vector.load %arg5[%c0_50, %c11, %c640] : memref<1x16x704xf32, #tpu.memory_space<vmem>>, vector<1x5x64xf32>
    tpu.vector_store %arg5[%c0_50, %c11, %c640], %38 {strides = array<i32>} : memref<1x16x704xf32, #tpu.memory_space<vmem>>, vector<1x5x64xf32>,
    %40 = vector.extract_strided_slice %0 {offsets = [0, 5, 0], sizes = [1, 11, 64], strides = [1, 1, 1]} : vector<1x16x64xf32> to vector<1x11x64xf32>
    %c0_51 = arith.constant 0 : index
    %c0_52 = arith.constant 0 : index
    %c640_53 = arith.constant 640 : index
    %41 = vector.load %arg5[%c0_51, %c0_52, %c640_53] : memref<1x16x704xf32, #tpu.memory_space<vmem>>, vector<1x11x64xf32>
    tpu.vector_store %arg5[%c0_51, %c0_52, %c640_53], %40 {strides = array<i32>} : memref<1x16x704xf32, #tpu.memory_space<vmem>>, vector<1x11x64xf32>,
    %c0_54 = arith.constant 0 : index
    %c0_55 = arith.constant 0 : index
    %c0_56 = arith.constant 0 : index
    %42 = vector.load %arg5[%c0_54, %c0_55, %c0_56] : memref<1x16x704xf32, #tpu.memory_space<vmem>>, vector<1x16x704xf32>
    %43 = vector.shape_cast %42 : vector<1x16x704xf32> to vector<16x704xf32>
    %44 = arith.truncf %43 : vector<16x704xf32> to vector<16x704xbf16>
    %c0_57 = arith.constant 0 : index
    %c0_58 = arith.constant 0 : index
    %45 = vector.load %arg2[%c0_57, %c0_58] : memref<704x128xbf16, #tpu.memory_space<vmem>>, vector<704x128xbf16>
    %cst_59 = arith.constant dense<0.000000e+00> : vector<16x128xf32>
    %46 = tpu.matmul %44, %45, %cst_59 {dimension_numbers = #tpu.dot_dimension_numbers<[1], [0], [0], [1], [0, 0, 1, 1], [], []>} : vector<16x704xbf16>, vector<704x128xbf16>, vector<16x128xf32> -> vector<16x128xf32>
    %c0_60 = arith.constant 0 : index
    %c0_61 = arith.constant 0 : index
    %47 = vector.load %arg3[%c0_60, %c0_61] : memref<1x128xf32, #tpu.memory_space<vmem>>, vector<1x128xf32>
    %48 = vector.broadcast %47 : vector<1x128xf32> to vector<16x128xf32>
    %49 = arith.addf %46, %48 : vector<16x128xf32>
    %50 = vector.shape_cast %49 : vector<16x128xf32> to vector<1x16x128xf32>
    %c0_62 = arith.constant 0 : index
    %c0_63 = arith.constant 0 : index
    %c0_64 = arith.constant 0 : index
    %51 = vector.load %arg4[%c0_62, %c0_63, %c0_64] : memref<1x16x128xf32, #tpu.memory_space<vmem>>, vector<1x16x128xf32>
    tpu.vector_store %arg4[%c0_62, %c0_63, %c0_64], %50 {strides = array<i32>} : memref<1x16x128xf32, #tpu.memory_space<vmem>>, vector<1x16x128xf32>,
    return
  }
  func.func @transform_0(%arg0: i32) -> (i32, i32, i32) {
    %c0_i32 = arith.constant 0 : i32
    %c0_i32_0 = arith.constant 0 : i32
    %c0_i32_1 = arith.constant 0 : i32
    return %arg0, %c0_i32, %c0_i32_0 : i32, i32, i32
  }
  func.func @transform_1(%arg0: i32) -> (i32, i32) {
    %c0_i32 = arith.constant 0 : i32
    %c0_i32_0 = arith.constant 0 : i32
    %c0_i32_1 = arith.constant 0 : i32
    return %c0_i32, %c0_i32_0 : i32, i32
  }
  func.func @transform_2(%arg0: i32) -> (i32, i32) {
    %c0_i32 = arith.constant 0 : i32
    %c0_i32_0 = arith.constant 0 : i32
    %c0_i32_1 = arith.constant 0 : i32
    return %c0_i32, %c0_i32_0 : i32, i32
  }
  func.func @transform_3(%arg0: i32) -> (i32, i32, i32) {
    %c0_i32 = arith.constant 0 : i32
    %c0_i32_0 = arith.constant 0 : i32
    %c0_i32_1 = arith.constant 0 : i32
    return %arg0, %c0_i32, %c0_i32_0 : i32, i32, i32
  }
}

</mosaic_0001>

<llo_original>
// kernel: tpu_custom_call.1
$region0: #{tpu_custom_call.1}
  #allocation0 [shape = 'u32[]', space=smem, size = 0x4, offset = 0x4, fixed_abs, tag = 'smem constant byte address 0x4 - core index']
  #allocation1 [shape = 'u32[72,128]{1,0:T(1,128)}', space=vmem, size = 0x9000, scoped, tag = 'internal scratch']
  #allocation2 [shape = 'f32[1,16,704]{2,1,0:T(8,128)}', space=vmem, size = 0xc000, scoped, tag = 'scratch operand']
  %s0 = inlined_call_operand.hbm [shape: f32[2,16,64], index: 0, kind: input, shape index: {}]
  %s1 = inlined_call_operand.hbm [shape: bf16[704,128], index: 1, kind: input, shape index: {}]
  %s2 = inlined_call_operand.vmem [shape: f32[1,128], index: 2, kind: input, shape index: {}]
  %s3 = inlined_call_operand.hbm [shape: f32[2,16,128], index: 3, kind: output, shape index: {}]
  %s4 = sld [smem:[#allocation0]]
  $region53: #{tpu_custom_call.1} parent=0
    _
  %s6 = ssub.s32 1, %s4
  %s7 = scalar_select 0, %s6, %s4
  $region1: #{tpu_custom_call.1} parent=0
    #allocation3 [shape = 'u8[16384]{0}', space=vmem, size = 0x4000, scoped, tag = 'input window, operand 0']
    #allocation4 [shape = 's32[2]{0}', space=sflag, size = 0x8, scoped, tag = 'scoped memory for tpu_custom_call.1']
    #allocation5 [shape = 's32[2]{0}', space=sflag, size = 0x8, scoped, tag = 'scoped memory for tpu_custom_call.1']
    #allocation6 [shape = 'u8[180224]{0}', space=vmem, size = 0x2c000, scoped, tag = 'input window, operand 1, single buffered']
    #allocation7 [shape = 's32[1]{0}', space=sflag, size = 0x4, scoped, tag = 'scoped memory for tpu_custom_call.1']
    #allocation8 [shape = 'u8[16384]{0}', space=vmem, size = 0x4000, scoped, tag = 'output window, operand 0']
    %8 = vsyncpa [#allocation4], 0
    %s9 = scalar_lea.sflag [#allocation4], 1
    %10 = vsyncpa %s9, 0
    %11 = vsyncpa [#allocation7], 0
    %12 = vsyncpa [#allocation5], 0
    %s13 = scalar_lea.sflag [#allocation5], 1
    %14 = vsyncpa %s13, 0
    loop: start=0, step=1, limit=4
    $region2: #{tpu_custom_call.1} parent=1 // loop_pre_header
      _
    $region3: #{tpu_custom_call.1} parent=1 // loop_header
      %s16 = sphi 0, %s20
      %p17 = scmp.ge.s32.totalorder %s16, 4
      %s26 = sphi 0, %s28
      %s29 = sphi 0, %s26
      %s30 = sphi 0, %s29
      %s46 = sphi 0, %s30
      %s50 = sphi 0, %s50
      %s52 = sphi 0, %s50
      %s53 = sphi 0, %s52
      %s67 = sphi 0, %s53
      %s71 = sphi 0, %s71
      %s73 = sphi 0, %s71
      %s74 = sphi 0, %s73
      %s88 = sphi 0, %s74
      %s94 = sphi 0, %s96
      %s97 = sphi 0, %s94
      %s98 = sphi 0, %s97
      %s114 = sphi 0, %s98
    $region4: #{tpu_custom_call.1} parent=1 // loop_header_branch
      %19 = sbr.rel (%p17) target = $region8
    $region5: #{tpu_custom_call.1} parent=1 // loop_body
      %s21 = ssub.s32 %s16, 1
      %s22 = ssub.s32 %s16, 2
      %s23 = sadd.s32 %s16, 1
      %s24 = ssub.s32 %s16, %s23
      %p25 = scmp.eq.s32.totalorder %s24, 0
      %s27 = sadd.s32 %s26, 1
      %s28 = scalar_select %p25, %s26, %s27
      %p31 = pneg %p25
      %p32 = scmp.eq.s32.totalorder %s16, 1
      %p33 = por %p31, %p32
      %p34 = scmp.ne.s32.totalorder %s26, %s29
      %p35 = scmp.eq.s32.totalorder %s16, 0
      %p36 = por %p34, %p35
      %p37 = scmp.ne.s32.totalorder %s26, %s29
      %p38 = scmp.eq.s32.totalorder %s21, 1
      %p39 = por %p37, %p38
      %p40 = scmp.ne.s32.totalorder %s29, %s30
      %p41 = scmp.eq.s32.totalorder %s21, 0
      %p42 = por %p40, %p41
      %p43 = scmp.ne.s32.totalorder %s29, %s30
      %p44 = scmp.eq.s32.totalorder %s22, 1
      %p45 = por %p43, %p44
      %p47 = scmp.ne.s32.totalorder %s30, %s46
      %p48 = scmp.eq.s32.totalorder %s22, 0
      %p49 = por %p47, %p48
      %s51 = sadd.s32 %s50, 1
      %p54 = scmp.eq.s32.totalorder %s16, 1
      %p55 = scmp.ne.s32.totalorder %s50, %s52
      %p56 = scmp.eq.s32.totalorder %s16, 0
      %p57 = por %p55, %p56
      %p58 = scmp.ne.s32.totalorder %s50, %s52
      %p59 = scmp.eq.s32.totalorder %s21, 1
      %p60 = por %p58, %p59
      %p61 = scmp.ne.s32.totalorder %s52, %s53
      %p62 = scmp.eq.s32.totalorder %s21, 0
      %p63 = por %p61, %p62
      %p64 = scmp.ne.s32.totalorder %s52, %s53
      %p65 = scmp.eq.s32.totalorder %s22, 1
      %p66 = por %p64, %p65
      %p68 = scmp.ne.s32.totalorder %s53, %s67
      %p69 = scmp.eq.s32.totalorder %s22, 0
      %p70 = por %p68, %p69
      %s72 = sadd.s32 %s71, 1
      %p75 = scmp.eq.s32.totalorder %s16, 1
      %p76 = scmp.ne.s32.totalorder %s71, %s73
      %p77 = scmp.eq.s32.totalorder %s16, 0
      %p78 = por %p76, %p77
      %p79 = scmp.ne.s32.totalorder %s71, %s73
      %p80 = scmp.eq.s32.totalorder %s21, 1
      %p81 = por %p79, %p80
      %p82 = scmp.ne.s32.totalorder %s73, %s74
      %p83 = scmp.eq.s32.totalorder %s21, 0
      %p84 = por %p82, %p83
      %p85 = scmp.ne.s32.totalorder %s73, %s74
      %p86 = scmp.eq.s32.totalorder %s22, 1
      %p87 = por %p85, %p86
      %p89 = scmp.ne.s32.totalorder %s74, %s88
      %p90 = scmp.eq.s32.totalorder %s22, 0
      %p91 = por %p89, %p90
      %s92 = ssub.s32 %s16, %s23
      %p93 = scmp.eq.s32.totalorder %s92, 0
      %s95 = sadd.s32 %s94, 1
      %s96 = scalar_select %p93, %s94, %s95
      %p99 = pneg %p93
      %p100 = scmp.eq.s32.totalorder %s16, 1
      %p101 = por %p99, %p100
      %p102 = scmp.ne.s32.totalorder %s94, %s97
      %p103 = scmp.eq.s32.totalorder %s16, 0
      %p104 = por %p102, %p103
      %p105 = scmp.ne.s32.totalorder %s94, %s97
      %p106 = scmp.eq.s32.totalorder %s21, 1
      %p107 = por %p105, %p106
      %p108 = scmp.ne.s32.totalorder %s97, %s98
      %p109 = scmp.eq.s32.totalorder %s21, 0
      %p110 = por %p108, %p109
      %p111 = scmp.ne.s32.totalorder %s97, %s98
      %p112 = scmp.eq.s32.totalorder %s22, 1
      %p113 = por %p111, %p112
      %p115 = scmp.ne.s32.totalorder %s98, %s114
      %p116 = scmp.eq.s32.totalorder %s22, 0
      %p117 = por %p115, %p116
      %p118 = scmp.le.s32.totalorder 1, %s16
      %p119 = scmp.lt.s32.totalorder %s16, 3
      %p120 = pnand %p118, %p119
      %p121 = pneg %p120
      // Predicated region
      $region9: #{tpu_custom_call.1} parent=5 // pred_check
        _
      $region10: #{tpu_custom_call.1} parent=5 // pred_check_branch
        %123 = sbr.rel (%p120) target = $region12
      $region11: #{tpu_custom_call.1} parent=5 // pred_region
        %s124 = ssub.s32 %s16, 1
        // Predicated region
        $region13: #{tpu_custom_call.1} parent=11 // pred_check
          %p125 = pneg %p63
        $region14: #{tpu_custom_call.1} parent=11 // pred_check_branch
          %127 = sbr.rel (%p125) target = $region16
        $region15: #{tpu_custom_call.1} parent=11 // pred_region
          %129 = vsyncadd [#allocation7], 0
          %s130 = sshll.u32 %s1, 4
          %s131 = int_to_ptr.hbm [resolvable:$true] %s130
          %s132 = sshll.u32 [#allocation6], 4
          %s133 = int_to_ptr.vmem [resolvable:$true] %s132
          %138 = dma.hbm_to_vmem [thread:$0]  %s131, 5632, %s133, [#allocation7], 64, 64, 4
        $region16: #{tpu_custom_call.1} parent=11 // pred_fallthru
          _
        // Predicated region
        $region17: #{tpu_custom_call.1} parent=11 // pred_check
          %p139 = pneg %p84
        $region18: #{tpu_custom_call.1} parent=11 // pred_check_branch
          %141 = sbr.rel (%p139) target = $region20
        $region19: #{tpu_custom_call.1} parent=11 // pred_region
          _
        $region20: #{tpu_custom_call.1} parent=11 // pred_fallthru
          _
      $region12: #{tpu_custom_call.1} parent=5 // pred_fallthru
        _
      %p142 = scmp.lt.s32.totalorder %s16, 2
      // Predicated region
      $region21: #{tpu_custom_call.1} parent=5 // pred_check
        %p143 = pneg %p142
      $region22: #{tpu_custom_call.1} parent=5 // pred_check_branch
        %145 = sbr.rel (%p143) target = $region24
      $region23: #{tpu_custom_call.1} parent=5 // pred_region
        // Predicated region
        $region25: #{tpu_custom_call.1} parent=23 // pred_check
          %p146 = pneg %p36
        $region26: #{tpu_custom_call.1} parent=23 // pred_check_branch
          %148 = sbr.rel (%p146) target = $region28
        $region27: #{tpu_custom_call.1} parent=23 // pred_region
          %s149 = sand.u32 %s26, 1
          %s150 = scalar_lea.sflag [#allocation4], %s149
          %s151 = sand.u32 %s26, 1
          %s152 = smul.addr %s151, 16
          %s153 = scalar_lea.vmem [#allocation3], %s152
          %155 = vsyncadd %s150, 0
          %s156 = smul.addr %s16, 2
          %s157 = smul.addr %s156, 8
          %s158 = scalar_lea.hbm %s0, %s157
          %s159 = sshll.u32 %s158, 4
          %s160 = int_to_ptr.hbm [resolvable:$true] %s159
          %s161 = sshll.u32 %s153, 4
          %s162 = int_to_ptr.vmem [resolvable:$true] %s161
          %167 = dma.hbm_to_vmem [thread:$0]  %s160, 256, %s162, %s150, 128, 128, 8
        $region28: #{tpu_custom_call.1} parent=23 // pred_fallthru
          _
      $region24: #{tpu_custom_call.1} parent=5 // pred_fallthru
        _
      %p168 = scmp.le.s32.totalorder 1, %s16
      %p169 = scmp.lt.s32.totalorder %s16, 3
      %p170 = pnand %p168, %p169
      %p171 = pneg %p170
      // Predicated region
      $region29: #{tpu_custom_call.1} parent=5 // pred_check
        _
      $region30: #{tpu_custom_call.1} parent=5 // pred_check_branch
        %173 = sbr.rel (%p170) target = $region32
      $region31: #{tpu_custom_call.1} parent=5 // pred_region
        %s174 = ssub.s32 %s16, 1
        %s175 = sand.u32 %s29, 1
        %s176 = scalar_lea.sflag [#allocation4], %s175
        %s177 = sand.u32 %s29, 1
        %s178 = smul.addr %s177, 16
        %s179 = scalar_lea.vmem [#allocation3], %s178
        // Predicated region
        $region33: #{tpu_custom_call.1} parent=31 // pred_check
          %p180 = pneg %p42
        $region34: #{tpu_custom_call.1} parent=31 // pred_check_branch
          %182 = sbr.rel (%p180) target = $region36
        $region35: #{tpu_custom_call.1} parent=31 // pred_region
          %184 = dma.done %s176, 256
        $region36: #{tpu_custom_call.1} parent=31 // pred_fallthru
          _
        // Predicated region
        $region37: #{tpu_custom_call.1} parent=31 // pred_check
          %p185 = pneg %p63
        $region38: #{tpu_custom_call.1} parent=31 // pred_check_branch
          %187 = sbr.rel (%p185) target = $region40
        $region39: #{tpu_custom_call.1} parent=31 // pred_region
          %189 = dma.done [#allocation7], 5632
        $region40: #{tpu_custom_call.1} parent=31 // pred_fallthru
          _
        %s190 = sand.u32 %s29, 1
        %s191 = scalar_lea.sflag [#allocation4], %s190
        %s192 = sand.u32 %s29, 1
        %s193 = smul.addr %s192, 16
        %s194 = scalar_lea.vmem [#allocation3], %s193
        %p195 = pneg %p42
        %p196 = pneg %p39
        %p197 = pneg %p63
        %p198 = pneg %p60
        %p199 = pneg %p84
        %p200 = pneg %p81
        %p201 = pneg %p110
        %p202 = pneg %p107
        %s203 = sand.u32 %s97, 1
        %s204 = scalar_lea.sflag [#allocation5], %s203
        %s205 = sand.u32 %s97, 1
        %s206 = smul.addr %s205, 16
        %s207 = scalar_lea.vmem [#allocation8], %s206
        %v209 = vld [vmem:[%s179] sm:$0xff]
        %v210 = vld [vmem:[%s179 + $0x8] sm:$0xff]
        %vm211 = vcmask 520192
        %212 = vst.msk [vmem:[#allocation2] sm:$0x1f] %vm211, 0.0
        %vm215 = vcmask 1044480
        %v216 = vrot.slane %v209, 3
        %v217 = vrot.slane %v210, 3
        %v218 = vsel %vm215, %v216, %v217
        %vm221 = vcmask 523269
        %222 = vst.msk [vmem:[#allocation2] sm:$0xe0] %vm221, %v216
        %vm223 = vcmask 523264
        %224 = vst.msk [vmem:[#allocation2 + $0x30] sm:$0xff] %vm223, %v218
        %vm225 = vcmask 1043968
        %226 = vst.msk [vmem:[#allocation2] sm:$0xf] %vm225, 0.0
        %vm227 = vcmask 1043456
        %v228 = vrot.slane %v209, 4
        %v229 = vrot.slane %v210, 4
        %v230 = vsel %vm227, %v228, %v229
        %231 = vrot.lane.b32.xlu0 %v228, 64
        %v232 = vpop.permute.xlu0 %231
        %233 = vrot.lane.b32.xlu0 %v230, 64
        %v234 = vpop.permute.xlu0 %233
        %vm237 = vcmask 1048068
        %238 = vst.msk [vmem:[#allocation2] sm:$0xf0] %vm237, %v232
        %vm239 = vcmask 1048064
        %240 = vst.msk [vmem:[#allocation2 + $0x30] sm:$0xff] %vm239, %v234
        %vm241 = vcmask 518144
        %242 = vst.msk [vmem:[#allocation2 + $0x8] sm:$0x7] %vm241, 0.0
        %vm243 = vcmask 1042432
        %v244 = vrot.slane %v209, 5
        %v245 = vrot.slane %v210, 5
        %v246 = vsel %vm243, %v244, %v245
        %vm249 = vcmask 523267
        %250 = vst.msk [vmem:[#allocation2 + $0x8] sm:$0xf8] %vm249, %v244
        %251 = vst.msk [vmem:[#allocation2 + $0x38] sm:$0xff] %vm223, %v246
        %vm252 = vcmask 1041920
        %253 = vst.msk [vmem:[#allocation2 + $0x8] sm:$0x3] %vm252, 0.0
        %vm254 = vcmask 1041408
        %v255 = vrot.slane %v209, 6
        %v256 = vrot.slane %v210, 6
        %v257 = vsel %vm254, %v255, %v256
        %258 = vrot.lane.b32.xlu0 %v255, 64
        %v259 = vpop.permute.xlu0 %258
        %260 = vrot.lane.b32.xlu0 %v257, 64
        %v261 = vpop.permute.xlu0 %260
        %vm264 = vcmask 1048066
        %265 = vst.msk [vmem:[#allocation2 + $0x8] sm:$0xfc] %vm264, %v259
        %266 = vst.msk [vmem:[#allocation2 + $0x38] sm:$0xff] %vm239, %v261
        %vm267 = vcmask 516096
        %268 = vst.msk [vmem:[#allocation2 + $0x10] sm:$0x1] %vm267, 0.0
        %vm269 = vcmask 1040384
        %v270 = vrot.slane %v209, 7
        %v271 = vrot.slane %v210, 7
        %v272 = vsel %vm269, %v270, %v271
        %vm275 = vcmask 523265
        %276 = vst.msk [vmem:[#allocation2 + $0x10] sm:$0xfe] %vm275, %v270
        %277 = vst.msk [vmem:[#allocation2 + $0x40] sm:$0xff] %vm223, %v272
        %278 = vrot.lane.b32.xlu0 %v209, 64
        %v279 = vpop.permute.xlu0 %278
        %280 = vrot.lane.b32.xlu0 %v210, 64
        %v281 = vpop.permute.xlu0 %280
        %284 = vst.msk [vmem:[#allocation2 + $0x10] sm:$0xff] %vm239, %v279
        %285 = vst.msk [vmem:[#allocation2 + $0x40] sm:$0xff] %vm239, %v281
        %286 = vst.msk [vmem:[#allocation2 + $0x4f] sm:$0x1] %vm267, 0.0
        %vm287 = vcmask 1046528
        %v288 = vrot.slane %v209, 1
        %v289 = vrot.slane %v210, 1
        %v290 = vsel %vm287, %v288, %v289
        %293 = vst.msk [vmem:[#allocation2 + $0x18] sm:$0xff] %vm223, %v290
        %vm294 = vcmask 522240
        %295 = vst.msk [vmem:[#allocation2 + $0x48] sm:$0x7f] %vm294, %v289
        %vm296 = vcmask 1048070
        %297 = vst.msk [vmem:[#allocation2 + $0x48] sm:$0xc0] %vm296, 0.0
        %vm298 = vcmask 1045504
        %v299 = vrot.slane %v209, 2
        %v300 = vrot.slane %v210, 2
        %v301 = vsel %vm298, %v299, %v300
        %302 = vrot.lane.b32.xlu0 %v301, 64
        %v303 = vpop.permute.xlu0 %302
        %304 = vrot.lane.b32.xlu0 %v300, 64
        %v305 = vpop.permute.xlu0 %304
        %308 = vst.msk [vmem:[#allocation2 + $0x18] sm:$0xff] %vm239, %v303
        %vm309 = vcmask 1046016
        %310 = vst.msk [vmem:[#allocation2 + $0x48] sm:$0x3f] %vm309, %v305
        %311 = vst.msk [vmem:[#allocation2 + $0x50] sm:$0xe0] %vm221, 0.0
        %313 = vst.msk [vmem:[#allocation2 + $0x20] sm:$0xff] %vm223, %v218
        %314 = vst.msk [vmem:[#allocation2 + $0x50] sm:$0x1f] %vm211, %v217
        %315 = vst.msk [vmem:[#allocation2 + $0x50] sm:$0xf0] %vm237, 0.0
        %316 = vrot.lane.b32.xlu0 %v229, 64
        %v317 = vpop.permute.xlu0 %316
        %319 = vst.msk [vmem:[#allocation2 + $0x20] sm:$0xff] %vm239, %v234
        %320 = vst.msk [vmem:[#allocation2 + $0x50] sm:$0xf] %vm225, %v317
        %321 = vst.msk [vmem:[#allocation2 + $0x58] sm:$0xf8] %vm249, 0.0
        %323 = vst.msk [vmem:[#allocation2 + $0x28] sm:$0xff] %vm223, %v246
        %324 = vst.msk [vmem:[#allocation2 + $0x58] sm:$0x7] %vm241, %v245
        %v325 = vld [vmem:[#allocation2] sm:$0xff]
        %v326 = vld [vmem:[#allocation2 + $0x8] sm:$0xff]
        %v327 = vld [vmem:[#allocation2 + $0x10] sm:$0xff]
        %v328 = vld [vmem:[#allocation2 + $0x18] sm:$0xff]
        %v329 = vld [vmem:[#allocation2 + $0x20] sm:$0xff]
        %v330 = vld [vmem:[#allocation2 + $0x28] sm:$0xff]
        %v331 = vld [vmem:[#allocation2 + $0x30] sm:$0xff]
        %v332 = vld [vmem:[#allocation2 + $0x38] sm:$0xff]
        %v333 = vld [vmem:[#allocation2 + $0x40] sm:$0xff]
        %v334 = vld [vmem:[#allocation2 + $0x48] sm:$0xff]
        %v335 = vld [vmem:[#allocation2 + $0x50] sm:$0xff]
        %v336 = vld [vmem:[#allocation2 + $0x58] sm:$0xff]
        %v337 = vpack.c.bf16 %v331, %v325
        %v338 = vpack.c.bf16 %v332, %v326
        %v339 = vpack.c.bf16 %v333, %v327
        %v340 = vpack.c.bf16 %v334, %v328
        %v341 = vpack.c.bf16 %v335, %v329
        %v342 = vpack.c.bf16 %v336, %v330
        %v343 = vld [vmem:[#allocation6] sm:$0xf]
        %v344 = vld [vmem:[#allocation6 + $0x4] sm:$0xf]
        %v345 = vld [vmem:[#allocation6 + $0x8] sm:$0xf]
        %v346 = vld [vmem:[#allocation6 + $0xc] sm:$0xf]
        %v347 = vld [vmem:[#allocation6 + $0x10] sm:$0xf]
        %v348 = vld [vmem:[#allocation6 + $0x14] sm:$0xf]
        %v349 = vld [vmem:[#allocation6 + $0x18] sm:$0xf]
        %v350 = vld [vmem:[#allocation6 + $0x1c] sm:$0xf]
        %v351 = vld [vmem:[#allocation6 + $0x20] sm:$0xf]
        %v352 = vld [vmem:[#allocation6 + $0x24] sm:$0xf]
        %v353 = vld [vmem:[#allocation6 + $0x28] sm:$0xf]
        %v354 = vld [vmem:[#allocation6 + $0x2c] sm:$0xf]
        %v355 = vld [vmem:[#allocation6 + $0x30] sm:$0xf]
        %v356 = vld [vmem:[#allocation6 + $0x34] sm:$0xf]
        %v357 = vld [vmem:[#allocation6 + $0x38] sm:$0xf]
        %v358 = vld [vmem:[#allocation6 + $0x3c] sm:$0xf]
        %v359 = vld [vmem:[#allocation6 + $0x40] sm:$0xf]
        %v360 = vld [vmem:[#allocation6 + $0x44] sm:$0xf]
        %v361 = vld [vmem:[#allocation6 + $0x48] sm:$0xf]
        %v362 = vld [vmem:[#allocation6 + $0x4c] sm:$0xf]
        %v363 = vld [vmem:[#allocation6 + $0x50] sm:$0xf]
        %v364 = vld [vmem:[#allocation6 + $0x54] sm:$0xf]
        %v365 = vld [vmem:[#allocation6 + $0x58] sm:$0xf]
        %v366 = vld [vmem:[#allocation6 + $0x5c] sm:$0xf]
        %v367 = vld [vmem:[#allocation6 + $0x60] sm:$0xf]
        %v368 = vld [vmem:[#allocation6 + $0x64] sm:$0xf]
        %v369 = vld [vmem:[#allocation6 + $0x68] sm:$0xf]
        %v370 = vld [vmem:[#allocation6 + $0x6c] sm:$0xf]
        %v371 = vld [vmem:[#allocation6 + $0x70] sm:$0xf]
        %v372 = vld [vmem:[#allocation6 + $0x74] sm:$0xf]
        %v373 = vld [vmem:[#allocation6 + $0x78] sm:$0xf]
        %v374 = vld [vmem:[#allocation6 + $0x7c] sm:$0xf]
        %v375 = vld [vmem:[#allocation6 + $0x80] sm:$0xf]
        %v376 = vld [vmem:[#allocation6 + $0x84] sm:$0xf]
        %v377 = vld [vmem:[#allocation6 + $0x88] sm:$0xf]
        %v378 = vld [vmem:[#allocation6 + $0x8c] sm:$0xf]
        %v379 = vld [vmem:[#allocation6 + $0x90] sm:$0xf]
        %v380 = vld [vmem:[#allocation6 + $0x94] sm:$0xf]
        %v381 = vld [vmem:[#allocation6 + $0x98] sm:$0xf]
        %v382 = vld [vmem:[#allocation6 + $0x9c] sm:$0xf]
        %v383 = vld [vmem:[#allocation6 + $0xa0] sm:$0xf]
        %v384 = vld [vmem:[#allocation6 + $0xa4] sm:$0xf]
        %v385 = vld [vmem:[#allocation6 + $0xa8] sm:$0xf]
        %v386 = vld [vmem:[#allocation6 + $0xac] sm:$0xf]
        %v387 = vld [vmem:[#allocation6 + $0xb0] sm:$0xf]
        %v388 = vld [vmem:[#allocation6 + $0xb4] sm:$0xf]
        %v389 = vld [vmem:[#allocation6 + $0xb8] sm:$0xf]
        %v390 = vld [vmem:[#allocation6 + $0xbc] sm:$0xf]
        %v391 = vld [vmem:[#allocation6 + $0xc0] sm:$0xf]
        %v392 = vld [vmem:[#allocation6 + $0xc4] sm:$0xf]
        %v393 = vld [vmem:[#allocation6 + $0xc8] sm:$0xf]
        %v394 = vld [vmem:[#allocation6 + $0xcc] sm:$0xf]
        %v395 = vld [vmem:[#allocation6 + $0xd0] sm:$0xf]
        %v396 = vld [vmem:[#allocation6 + $0xd4] sm:$0xf]
        %v397 = vld [vmem:[#allocation6 + $0xd8] sm:$0xf]
        %v398 = vld [vmem:[#allocation6 + $0xdc] sm:$0xf]
        %v399 = vld [vmem:[#allocation6 + $0xe0] sm:$0xf]
        %v400 = vld [vmem:[#allocation6 + $0xe4] sm:$0xf]
        %v401 = vld [vmem:[#allocation6 + $0xe8] sm:$0xf]
        %v402 = vld [vmem:[#allocation6 + $0xec] sm:$0xf]
        %v403 = vld [vmem:[#allocation6 + $0xf0] sm:$0xf]
        %v404 = vld [vmem:[#allocation6 + $0xf4] sm:$0xf]
        %v405 = vld [vmem:[#allocation6 + $0xf8] sm:$0xf]
        %v406 = vld [vmem:[#allocation6 + $0xfc] sm:$0xf]
        %v407 = vld [vmem:[#allocation6 + $0x100] sm:$0xf]
        %v408 = vld [vmem:[#allocation6 + $0x104] sm:$0xf]
        %v409 = vld [vmem:[#allocation6 + $0x108] sm:$0xf]
        %v410 = vld [vmem:[#allocation6 + $0x10c] sm:$0xf]
        %v411 = vld [vmem:[#allocation6 + $0x110] sm:$0xf]
        %v412 = vld [vmem:[#allocation6 + $0x114] sm:$0xf]
        %v413 = vld [vmem:[#allocation6 + $0x118] sm:$0xf]
        %v414 = vld [vmem:[#allocation6 + $0x11c] sm:$0xf]
        %v415 = vld [vmem:[#allocation6 + $0x120] sm:$0xf]
        %v416 = vld [vmem:[#allocation6 + $0x124] sm:$0xf]
        %v417 = vld [vmem:[#allocation6 + $0x128] sm:$0xf]
        %v418 = vld [vmem:[#allocation6 + $0x12c] sm:$0xf]
        %v419 = vld [vmem:[#allocation6 + $0x130] sm:$0xf]
        %v420 = vld [vmem:[#allocation6 + $0x134] sm:$0xf]
        %v421 = vld [vmem:[#allocation6 + $0x138] sm:$0xf]
        %v422 = vld [vmem:[#allocation6 + $0x13c] sm:$0xf]
        %v423 = vld [vmem:[#allocation6 + $0x140] sm:$0xf]
        %v424 = vld [vmem:[#allocation6 + $0x144] sm:$0xf]
        %v425 = vld [vmem:[#allocation6 + $0x148] sm:$0xf]
        %v426 = vld [vmem:[#allocation6 + $0x14c] sm:$0xf]
        %v427 = vld [vmem:[#allocation6 + $0x150] sm:$0xf]
        %v428 = vld [vmem:[#allocation6 + $0x154] sm:$0xf]
        %v429 = vld [vmem:[#allocation6 + $0x158] sm:$0xf]
        %v430 = vld [vmem:[#allocation6 + $0x15c] sm:$0xf]
        %v431 = vld [vmem:[%s2] sm:$0x1]
        %v433 = vperm.slane %v431, 0
        %v523 = vunpack.c.l.b16 %v343
        %v524 = vunpack.c.l.b16 %v344
        %v525 = vunpack.c.l.b16 %v345
        %v526 = vunpack.c.l.b16 %v346
        %v527 = vunpack.c.l.b16 %v347
        %v528 = vunpack.c.l.b16 %v348
        %v529 = vunpack.c.l.b16 %v349
        %v530 = vunpack.c.l.b16 %v350
        %v531 = vunpack.c.l.b16 %v351
        %v532 = vunpack.c.l.b16 %v352
        %v533 = vunpack.c.l.b16 %v353
        %v534 = vunpack.c.l.b16 %v354
        %v535 = vunpack.c.l.b16 %v355
        %v536 = vunpack.c.l.b16 %v356
        %v537 = vunpack.c.l.b16 %v357
        %v538 = vunpack.c.l.b16 %v358
        %v539 = vunpack.c.l.b16 %v359
        %v540 = vunpack.c.l.b16 %v360
        %v541 = vunpack.c.l.b16 %v361
        %v542 = vunpack.c.l.b16 %v362
        %v543 = vunpack.c.l.b16 %v363
        %v544 = vunpack.c.l.b16 %v364
        %v545 = vunpack.c.l.b16 %v365
        %v546 = vunpack.c.l.b16 %v366
        %v547 = vunpack.c.l.b16 %v367
        %v548 = vunpack.c.l.b16 %v368
        %v549 = vunpack.c.l.b16 %v369
        %v550 = vunpack.c.l.b16 %v370
        %v551 = vunpack.c.l.b16 %v371
        %v552 = vunpack.c.l.b16 %v372
        %v553 = vunpack.c.l.b16 %v373
        %v554 = vunpack.c.l.b16 %v374
        %v555 = vunpack.c.l.b16 %v375
        %v556 = vunpack.c.l.b16 %v376
        %v557 = vunpack.c.l.b16 %v377
        %v558 = vunpack.c.l.b16 %v378
        %v559 = vunpack.c.l.b16 %v379
        %v560 = vunpack.c.l.b16 %v380
        %v561 = vunpack.c.l.b16 %v381
        %v562 = vunpack.c.l.b16 %v382
        %v563 = vunpack.c.l.b16 %v383
        %v564 = vunpack.c.l.b16 %v384
        %v565 = vunpack.c.l.b16 %v385
        %v566 = vunpack.c.l.b16 %v386
        %v567 = vunpack.c.l.b16 %v387
        %v568 = vunpack.c.l.b16 %v388
        %v569 = vunpack.c.l.b16 %v389
        %v570 = vunpack.c.l.b16 %v390
        %v571 = vunpack.c.l.b16 %v391
        %v572 = vunpack.c.l.b16 %v392
        %v573 = vunpack.c.l.b16 %v393
        %v574 = vunpack.c.l.b16 %v394
        %v575 = vunpack.c.l.b16 %v395
        %v576 = vunpack.c.l.b16 %v396
        %v577 = vunpack.c.l.b16 %v397
        %v578 = vunpack.c.l.b16 %v398
        %v579 = vunpack.c.l.b16 %v399
        %v580 = vunpack.c.l.b16 %v400
        %v581 = vunpack.c.l.b16 %v401
        %v582 = vunpack.c.l.b16 %v402
        %v583 = vunpack.c.l.b16 %v403
        %v584 = vunpack.c.l.b16 %v404
        %v585 = vunpack.c.l.b16 %v405
        %v586 = vunpack.c.l.b16 %v406
        %v587 = vunpack.c.l.b16 %v407
        %v588 = vunpack.c.l.b16 %v408
        %v589 = vunpack.c.l.b16 %v409
        %v590 = vunpack.c.l.b16 %v410
        %v591 = vunpack.c.l.b16 %v411
        %v592 = vunpack.c.l.b16 %v412
        %v593 = vunpack.c.l.b16 %v413
        %v594 = vunpack.c.l.b16 %v414
        %v595 = vunpack.c.l.b16 %v415
        %v596 = vunpack.c.l.b16 %v416
        %v597 = vunpack.c.l.b16 %v417
        %v598 = vunpack.c.l.b16 %v418
        %v599 = vunpack.c.l.b16 %v419
        %v600 = vunpack.c.l.b16 %v420
        %v601 = vunpack.c.l.b16 %v421
        %v602 = vunpack.c.l.b16 %v422
        %v603 = vunpack.c.l.b16 %v423
        %v604 = vunpack.c.l.b16 %v424
        %v605 = vunpack.c.l.b16 %v425
        %v606 = vunpack.c.l.b16 %v426
        %v607 = vunpack.c.l.b16 %v427
        %v608 = vunpack.c.l.b16 %v428
        %v609 = vunpack.c.l.b16 %v429
        %v610 = vunpack.c.l.b16 %v430
        %v611 = vpack.c.b16 %v524, %v523
        %v612 = vpack.c.b16 %v526, %v525
        %v613 = vpack.c.b16 %v528, %v527
        %v614 = vpack.c.b16 %v530, %v529
        %v615 = vpack.c.b16 %v532, %v531
        %v616 = vpack.c.b16 %v534, %v533
        %v617 = vpack.c.b16 %v536, %v535
        %v618 = vpack.c.b16 %v538, %v537
        %v619 = vpack.c.b16 %v540, %v539
        %v620 = vpack.c.b16 %v542, %v541
        %v621 = vpack.c.b16 %v544, %v543
        %v622 = vpack.c.b16 %v546, %v545
        %v623 = vpack.c.b16 %v548, %v547
        %v624 = vpack.c.b16 %v550, %v549
        %v625 = vpack.c.b16 %v552, %v551
        %v626 = vpack.c.b16 %v554, %v553
        %v627 = vpack.c.b16 %v556, %v555
        %v628 = vpack.c.b16 %v558, %v557
        %v629 = vpack.c.b16 %v560, %v559
        %v630 = vpack.c.b16 %v562, %v561
        %v631 = vpack.c.b16 %v564, %v563
        %v632 = vpack.c.b16 %v566, %v565
        %v633 = vpack.c.b16 %v568, %v567
        %v634 = vpack.c.b16 %v570, %v569
        %v635 = vpack.c.b16 %v572, %v571
        %v636 = vpack.c.b16 %v574, %v573
        %v637 = vpack.c.b16 %v576, %v575
        %v638 = vpack.c.b16 %v578, %v577
        %v639 = vpack.c.b16 %v580, %v579
        %v640 = vpack.c.b16 %v582, %v581
        %v641 = vpack.c.b16 %v584, %v583
        %v642 = vpack.c.b16 %v586, %v585
        %v643 = vpack.c.b16 %v588, %v587
        %v644 = vpack.c.b16 %v590, %v589
        %v645 = vpack.c.b16 %v592, %v591
        %v646 = vpack.c.b16 %v594, %v593
        %v647 = vpack.c.b16 %v596, %v595
        %v648 = vpack.c.b16 %v598, %v597
        %v649 = vpack.c.b16 %v600, %v599
        %v650 = vpack.c.b16 %v602, %v601
        %v651 = vpack.c.b16 %v604, %v603
        %v652 = vpack.c.b16 %v606, %v605
        %v653 = vpack.c.b16 %v608, %v607
        %v654 = vpack.c.b16 %v610, %v609
        %v700 = vsel %vm223, %v342, 0
        %702 = vmatpush.bf16.msra.mxu0 %v618
        %703 = vmatpush.bf16.msra.mxu0 %v617
        %704 = vmatpush.bf16.msra.mxu0 %v616
        %705 = vmatpush.bf16.msra.mxu0 %v615
        %706 = vmatpush.bf16.msra.mxu0 %v614
        %707 = vmatpush.bf16.msra.mxu0 %v613
        %708 = vmatpush.bf16.msra.mxu0 %v612
        %709 = vmatpush.bf16.msra.mxu0 %v611
        %710 = vmatmul.bf16.gmra.mxu0 %v337
        %v711 = vpop.f32.mrf.mxu0
        %v712 = vadd.f32 %v433, %v711
        %v713 = vpop.f32.mrf.mxu0
        %v714 = vadd.f32 %v433, %v713
        %715 = vdwg.mxu0
        %716 = vmatpush.bf16.msra.mxu0 %v626
        %717 = vmatpush.bf16.msra.mxu0 %v625
        %718 = vmatpush.bf16.msra.mxu0 %v624
        %719 = vmatpush.bf16.msra.mxu0 %v623
        %720 = vmatpush.bf16.msra.mxu0 %v622
        %721 = vmatpush.bf16.msra.mxu0 %v621
        %722 = vmatpush.bf16.msra.mxu0 %v620
        %723 = vmatpush.bf16.msra.mxu0 %v619
        %724 = vmatmul.bf16.gmra.mxu0 %v338
        %v725 = vpop.f32.mrf.mxu0
        %v726 = vadd.f32 %v712, %v725
        %v727 = vpop.f32.mrf.mxu0
        %v728 = vadd.f32 %v714, %v727
        %729 = vdwg.mxu0
        %730 = vmatpush.bf16.msra.mxu0 %v634
        %731 = vmatpush.bf16.msra.mxu0 %v633
        %732 = vmatpush.bf16.msra.mxu0 %v632
        %733 = vmatpush.bf16.msra.mxu0 %v631
        %734 = vmatpush.bf16.msra.mxu0 %v630
        %735 = vmatpush.bf16.msra.mxu0 %v629
        %736 = vmatpush.bf16.msra.mxu0 %v628
        %737 = vmatpush.bf16.msra.mxu0 %v627
        %738 = vmatmul.bf16.gmra.mxu0 %v339
        %v739 = vpop.f32.mrf.mxu0
        %v740 = vadd.f32 %v726, %v739
        %v741 = vpop.f32.mrf.mxu0
        %v742 = vadd.f32 %v728, %v741
        %743 = vdwg.mxu0
        %744 = vmatpush.bf16.msra.mxu0 %v642
        %745 = vmatpush.bf16.msra.mxu0 %v641
        %746 = vmatpush.bf16.msra.mxu0 %v640
        %747 = vmatpush.bf16.msra.mxu0 %v639
        %748 = vmatpush.bf16.msra.mxu0 %v638
        %749 = vmatpush.bf16.msra.mxu0 %v637
        %750 = vmatpush.bf16.msra.mxu0 %v636
        %751 = vmatpush.bf16.msra.mxu0 %v635
        %752 = vmatmul.bf16.gmra.mxu0 %v340
        %v753 = vpop.f32.mrf.mxu0
        %v754 = vadd.f32 %v740, %v753
        %v755 = vpop.f32.mrf.mxu0
        %v756 = vadd.f32 %v742, %v755
        %757 = vdwg.mxu0
        %758 = vmatpush.bf16.msra.mxu0 %v650
        %759 = vmatpush.bf16.msra.mxu0 %v649
        %760 = vmatpush.bf16.msra.mxu0 %v648
        %761 = vmatpush.bf16.msra.mxu0 %v647
        %762 = vmatpush.bf16.msra.mxu0 %v646
        %763 = vmatpush.bf16.msra.mxu0 %v645
        %764 = vmatpush.bf16.msra.mxu0 %v644
        %765 = vmatpush.bf16.msra.mxu0 %v643
        %766 = vmatmul.bf16.gmra.mxu0 %v341
        %v767 = vpop.f32.mrf.mxu0
        %v768 = vadd.f32 %v754, %v767
        %v769 = vpop.f32.mrf.mxu0
        %v770 = vadd.f32 %v756, %v769
        %771 = vdwg.mxu0
        %772 = vmatpush.bf16.msra.mxu0 0
        %773 = vmatpush.bf16.msra.mxu0 0
        %774 = vmatpush.bf16.msra.mxu0 0
        %775 = vmatpush.bf16.msra.mxu0 0
        %776 = vmatpush.bf16.msra.mxu0 %v654
        %777 = vmatpush.bf16.msra.mxu0 %v653
        %778 = vmatpush.bf16.msra.mxu0 %v652
        %779 = vmatpush.bf16.msra.mxu0 %v651
        %780 = vmatmul.bf16.gmra.mxu0 %v700
        %v781 = vpop.f32.mrf.mxu0
        %v782 = vadd.f32 %v768, %v781
        %v783 = vpop.f32.mrf.mxu0
        %v784 = vadd.f32 %v770, %v783
        %785 = vdwg.mxu0
        %786 = vst [vmem:[%s207] sm:$0xff] %v782
        %787 = vst [vmem:[%s207 + $0x8] sm:$0xff] %v784
        %s788 = sand.u32 %s97, 1
        %s789 = scalar_lea.sflag [#allocation5], %s788
        %s790 = sand.u32 %s97, 1
        %s791 = smul.addr %s790, 16
        %s792 = scalar_lea.vmem [#allocation8], %s791
        // Predicated region
        $region41: #{tpu_custom_call.1} parent=31 // pred_check
          %p793 = pneg %p107
        $region42: #{tpu_custom_call.1} parent=31 // pred_check_branch
          %795 = sbr.rel (%p793) target = $region44
        $region43: #{tpu_custom_call.1} parent=31 // pred_region
          %797 = vsyncadd %s789, 0
          %s798 = smul.addr %s21, 2
          %s799 = smul.addr %s798, 8
          %s800 = scalar_lea.hbm %s3, %s799
          %s801 = sshll.u32 %s792, 4
          %s802 = int_to_ptr.vmem [resolvable:$true] %s801
          %s803 = sshll.u32 %s800, 4
          %s804 = int_to_ptr.hbm [resolvable:$true] %s803
          %809 = dma.vmem_to_hbm [thread:$0]  %s802, 256, %s804, %s789, 128, 128, 8
        $region44: #{tpu_custom_call.1} parent=31 // pred_fallthru
          _
      $region32: #{tpu_custom_call.1} parent=5 // pred_fallthru
        _
      %p810 = scmp.le.s32.totalorder 2, %s16
      // Predicated region
      $region45: #{tpu_custom_call.1} parent=5 // pred_check
        %p811 = pneg %p810
      $region46: #{tpu_custom_call.1} parent=5 // pred_check_branch
        %813 = sbr.rel (%p811) target = $region48
      $region47: #{tpu_custom_call.1} parent=5 // pred_region
        %s814 = ssub.s32 %s16, 2
        // Predicated region
        $region49: #{tpu_custom_call.1} parent=47 // pred_check
          %p815 = pneg %p113
        $region50: #{tpu_custom_call.1} parent=47 // pred_check_branch
          %817 = sbr.rel (%p815) target = $region52
        $region51: #{tpu_custom_call.1} parent=47 // pred_region
          %s818 = sand.u32 %s98, 1
          %s819 = scalar_lea.sflag [#allocation5], %s818
          %s820 = sand.u32 %s98, 1
          %s821 = smul.addr %s820, 16
          %s822 = scalar_lea.vmem [#allocation8], %s821
          %824 = dma.done %s819, 256
        $region52: #{tpu_custom_call.1} parent=47 // pred_fallthru
          _
      $region48: #{tpu_custom_call.1} parent=5 // pred_fallthru
        _
    $region6: #{tpu_custom_call.1} parent=1 // loop_footer
      %s20 = sadd.s32 1, %s16
    $region7: #{tpu_custom_call.1} parent=1 // loop_footer_branch
      %15 = sbr.rel target = $region3
    $region8: #{tpu_custom_call.1} parent=1 // loop_exit
      _
    %825 = vsyncpa [#allocation4], 1
    %s826 = scalar_lea.sflag [#allocation4], 1
    %827 = vsyncpa %s826, 1
    %828 = vsyncpa [#allocation7], 1
    %829 = vsyncpa [#allocation5], 1
    %s830 = scalar_lea.sflag [#allocation5], 1
    %831 = vsyncpa %s830, 1

</llo_original>
